<compile_context>
chip_gen: v5e
topology: v5e:2x2
jax: 0.10.0
libtpu: 0.0.40
codegen_flags: <defaults>
</compile_context>

<pallas_src>
import math

import jax
import jax.numpy as jnp
from jax.experimental import pallas as pl
from jax.experimental.pallas import tpu as pltpu


def _round_up(n, m):
    return ((n + m - 1) // m) * m


def _tpu_vmem_bytes():
    """Physical VMEM per TensorCore; conservative fallback if query fails."""
    try:
        info = pltpu.get_tpu_info()
        for attr in ("vmem_capacity_bytes", "vmem_size_bytes", "vmem_bytes"):
            v = getattr(info, attr, None)
            if v:
                return int(v)
    except Exception:
        pass
    return 64 * 1024 * 1024  # v7x per-TC VMEM (smallest current generation)


def _choose_lane_tile(L, B, cap):
    """Pick the L-tile: a multiple of 128 (or full L) minimizing padding waste."""
    if L <= 128:
        return L  # full extent also satisfies the (8, 128) block constraint
    best_t, best_waste = 128, None
    t = 128
    while t <= cap:
        waste = _round_up(L, t) - L
        if (best_waste is None or waste < best_waste
                or (waste == best_waste and t > best_t)):
            best_t, best_waste = t, waste
        t += 128
    # v7x has 2 TensorCores: keep the parallel grid length >= 2 when possible.
    if B == 1 and pl.cdiv(L, best_t) < 2:
        best_t = max(128, _round_up(pl.cdiv(L, 2), 128))
    return best_t


def _ff_kernel(x_ref, w1_ref, b1_ref, w2_ref, b2_ref, o_ref, h_ref):
    # x_ref: (Cin, TL) f32 tile of one batch element (batch dim squeezed).
    # Weights are bf16 (resident), biases f32; dots accumulate in f32 on MXU.
    x16 = x_ref[...].astype(jnp.bfloat16)
    h = jnp.dot(w1_ref[...], x16, preferred_element_type=jnp.float32)
    h = jnp.maximum(h + b1_ref[...], 0.0)            # bias + ReLU in f32
    # Dropout == identity in eval mode (see TODO at top of file).
    h_ref[...] = h.astype(jnp.bfloat16)              # explicit bf16 staging
    y = jnp.dot(w2_ref[...], h_ref[...], preferred_element_type=jnp.float32)
    o_ref[...] = (y + b2_ref[...]).astype(o_ref.dtype)


def fc_feedforward(x, params):
    """Pallas implementation of FCFeedForward.forward (eval mode).

    x:      (B, C_in, L) float32
    params: dict with W1 (C_mid, C_in), b1 (C_mid, 1),
                      W2 (C_out, C_mid), b2 (C_out, 1)
    returns (B, C_out, L) float32
    """
    W1, b1 = params["W1"], params["b1"]
    W2, b2 = params["W2"], params["b2"]
    B, Cin, L = x.shape
    Cmid = W1.shape[0]
    Cout = W2.shape[0]

    # ---- Weight prep (once; resident across the whole grid) ----------------
    Cmid_p = _round_up(Cmid, 16)  # bf16 sublane packing for the hidden dim
    W1p = jnp.zeros((Cmid_p, Cin), jnp.bfloat16).at[:Cmid, :].set(
        W1.astype(jnp.bfloat16))
    b1p = jnp.zeros((Cmid_p, 1), jnp.float32).at[:Cmid, :].set(
        b1.astype(jnp.float32))
    W2p = jnp.zeros((Cout, Cmid_p), jnp.bfloat16).at[:, :Cmid].set(
        W2.astype(jnp.bfloat16))
    b2p = b2.astype(jnp.float32)

    # ---- Tiling / VMEM budget (generation-aware) ----------------------------
    vmem_phys = _tpu_vmem_bytes()
    tl_cap = 1024 if vmem_phys >= 96 * 1024 * 1024 else 512
    TL = _choose_lane_tile(L, B, tl_cap)
    grid = (B, pl.cdiv(L, TL))

    vmem_needed = (
        2 * Cin * TL * 4                              # x tiles, double-buffered (f32)
        + 2 * Cout * TL * 4                           # out tiles, double-buffered (f32)
        + 2 * (Cmid_p * Cin + Cout * Cmid_p) * 2      # weights (bf16, <=2 bufs)
        + 2 * (Cmid_p + Cout) * 4                     # biases (f32, <=2 bufs)
        + Cmid_p * TL * 2                             # h scratch (bf16)
    )
    vmem_limit = int(min(0.75 * vmem_phys,
                         max(2 * vmem_needed, 32 * 1024 * 1024)))

    cost = None
    if hasattr(pl, "CostEstimate"):
        cost = pl.CostEstimate(
            flops=2 * B * L * (Cmid_p * Cin + Cout * Cmid_p),
            transcendentals=0,
            bytes_accessed=(B * Cin * L * 4 + B * Cout * L * 4
                            + (Cmid_p * Cin + Cout * Cmid_p) * 2
                            + (Cmid_p + Cout) * 4),
        )

    out_shape = jax.ShapeDtypeStruct((B, Cout, L), jnp.float32)
    squeezed = pl.Squeezed() if hasattr(pl, "Squeezed") else None

    def build_and_run(single_buffer_weights):
        # Constant-index-map operands don't need double buffering.
        wmode = ({"pipeline_mode": pl.Buffered(1)}
                 if single_buffer_weights else {})
        grid_spec = pltpu.PrefetchScalarGridSpec(
            num_scalar_prefetch=0,
            grid=grid,
            in_specs=[
                # Activation tile in native (B, Cin, L) layout, batch squeezed.
                pl.BlockSpec((squeezed, Cin, TL), lambda b, j: (b, 0, j)),
                # Resident weights / biases.
                pl.BlockSpec((Cmid_p, Cin), lambda b, j: (0, 0), **wmode),
                pl.BlockSpec((Cmid_p, 1), lambda b, j: (0, 0), **wmode),
                pl.BlockSpec((Cout, Cmid_p), lambda b, j: (0, 0), **wmode),
                pl.BlockSpec((Cout, 1), lambda b, j: (0, 0), **wmode),
            ],
            out_specs=pl.BlockSpec((squeezed, Cout, TL),
                                   lambda b, j: (b, 0, j)),
            scratch_shapes=[pltpu.VMEM((Cmid_p, TL), jnp.bfloat16)],
        )
        return pl.pallas_call(
            _ff_kernel,
            out_shape=out_shape,
            grid_spec=grid_spec,
            compiler_params=pltpu.CompilerParams(
                dimension_semantics=("parallel", "parallel"),
                vmem_limit_bytes=vmem_limit),
            cost_estimate=cost,
        )(x, W1p, b1p, W2p, b2p)

    try:
        return build_and_run(True)
    except Exception:
        # Fallback for Pallas versions that reject Buffered(1) / pipeline_mode.
        return build_and_run(False)


def ref_fc_feedforward(x, params):
    """Pure-JAX float32 reference replicating the PyTorch semantics (eval)."""
    conv = lambda W, b, z: jnp.einsum("oi,bil->bol", W, z) + b[None, :, :]
    h = jnp.maximum(conv(params["W1"], params["b1"], x), 0.0)
    # Dropout is identity in eval mode.
    return conv(params["W2"], params["b2"], h)


def ref_fc_feedforward_bf16(x, params):
    """Reference mirroring the kernel's bf16-operand / f32-accumulate math."""
    bf = jnp.bfloat16
    conv = lambda W, b, z: (
        jnp.einsum("oi,bil->bol", W.astype(bf), z.astype(bf),
                   preferred_element_type=jnp.float32) + b[None, :, :])
    h = jnp.maximum(conv(params["W1"], params["b1"], x), 0.0)
    return conv(params["W2"], params["b2"], h)


def make_params(key, in_channels, out_channels):
    """Deterministic Conv1d(kernel_size=1) params (PyTorch fan-in uniform init)."""
    def conv_params(k, c_out, c_in):
        k1, k2 = jax.random.split(k)
        bound = 1.0 / math.sqrt(c_in)
        W = jax.random.uniform(k1, (c_out, c_in), jnp.float32, -bound, bound)
        b = jax.random.uniform(k2, (c_out, 1), jnp.float32, -bound, bound)
        return W, b

    k1, k2 = jax.random.split(key)
    W1, b1 = conv_params(k1, out_channels, in_channels)
    W2, b2 = conv_params(k2, out_channels, out_channels)
    return {"W1": W1, "b1": b1, "W2": W2, "b2": b2}


if __name__ == "__main__":
    # Small config consistent with FCFeedForward(in_channels, out_channels).
    B, in_channels, out_channels, L = 2, 4, 8, 16

    key = jax.random.PRNGKey(0)
    kx, kp = jax.random.split(key)

    x = jax.random.normal(kx, (B, in_channels, L), jnp.float32)
    params = make_params(kp, in_channels, out_channels)

    out = jax.block_until_ready(fc_feedforward(x, params))
    assert out.shape == (B, out_channels, L)

    # Rigorous check: identical numerics (bf16 operands, f32 accumulation).
    ref_bf = ref_fc_feedforward_bf16(x, params)
    assert jnp.allclose(out, ref_bf, atol=1e-3, rtol=1e-3), \
        "mismatch vs bf16-matched reference"

    # Sanity check vs the PyTorch-style f32 reference (bf16-level tolerance).
    ref32 = ref_fc_feedforward(x, params)
    assert jnp.allclose(out, ref32, atol=1e-1, rtol=1e-1), \
        "mismatch vs f32 reference"

    print("KERNEL_OK")
</pallas_src>

<mosaic_0001>
module attributes {stable_mosaic.version = 11 : i64} {
  func.func @_ff_kernel(%arg0: i32, %arg1: i32, %arg2: memref<1x4x16xf32, #tpu.memory_space<vmem>>, %arg3: memref<16x4xbf16, #tpu.memory_space<vmem>>, %arg4: memref<16x1xf32, #tpu.memory_space<vmem>>, %arg5: memref<8x16xbf16, #tpu.memory_space<vmem>>, %arg6: memref<8x1xf32, #tpu.memory_space<vmem>>, %arg7: memref<1x8x16xf32, #tpu.memory_space<vmem>>, %arg8: memref<16x16xbf16, #tpu.memory_space<vmem>>) attributes {dimension_semantics = [#tpu.dimension_semantics<parallel>, #tpu.dimension_semantics<parallel>], iteration_bounds = array<i64: 2, 1>, scalar_prefetch = 0 : i64, scratch_operands = 1 : i64, tpu.core_type = #tpu.core_type<tc>, window_params = [{transform_indices = @transform_0, window_bounds = array<i64: 1, 4, 16>}, {pipeline_mode = #tpu.pipeline_mode<synchronous>, transform_indices = @transform_1, window_bounds = array<i64: 16, 4>}, {pipeline_mode = #tpu.pipeline_mode<synchronous>, transform_indices = @transform_2, window_bounds = array<i64: 16, 1>}, {pipeline_mode = #tpu.pipeline_mode<synchronous>, transform_indices = @transform_3, window_bounds = array<i64: 8, 16>}, {pipeline_mode = #tpu.pipeline_mode<synchronous>, transform_indices = @transform_4, window_bounds = array<i64: 8, 1>}, {transform_indices = @transform_5, window_bounds = array<i64: 1, 8, 16>}]} {
    %c0 = arith.constant 0 : index
    %c0_0 = arith.constant 0 : index
    %c0_1 = arith.constant 0 : index
    %0 = vector.load %arg2[%c0, %c0_0, %c0_1] : memref<1x4x16xf32, #tpu.memory_space<vmem>>, vector<1x4x16xf32>
    %1 = vector.shape_cast %0 : vector<1x4x16xf32> to vector<4x16xf32>
    %2 = arith.truncf %1 : vector<4x16xf32> to vector<4x16xbf16>
    %c0_2 = arith.constant 0 : index
    %c0_3 = arith.constant 0 : index
    %3 = vector.load %arg3[%c0_2, %c0_3] : memref<16x4xbf16, #tpu.memory_space<vmem>>, vector<16x4xbf16>
    %cst = arith.constant dense<0.000000e+00> : vector<16x16xf32>
    %4 = tpu.matmul %3, %2, %cst {dimension_numbers = #tpu.dot_dimension_numbers<[1], [0], [0], [1], [0, 0, 1, 1], [], []>} : vector<16x4xbf16>, vector<4x16xbf16>, vector<16x16xf32> -> vector<16x16xf32>
    %c0_4 = arith.constant 0 : index
    %c0_5 = arith.constant 0 : index
    %5 = vector.load %arg4[%c0_4, %c0_5] : memref<16x1xf32, #tpu.memory_space<vmem>>, vector<16x1xf32>
    %6 = vector.broadcast %5 : vector<16x1xf32> to vector<16x16xf32>
    %7 = arith.addf %4, %6 : vector<16x16xf32>
    %cst_6 = arith.constant 0.000000e+00 : f32
    %8 = vector.broadcast %cst_6 : f32 to vector<16x16xf32>
    %9 = arith.maximumf %7, %8 : vector<16x16xf32>
    %10 = arith.truncf %9 : vector<16x16xf32> to vector<16x16xbf16>
    %c0_7 = arith.constant 0 : index
    %c0_8 = arith.constant 0 : index
    %11 = vector.load %arg8[%c0_7, %c0_8] : memref<16x16xbf16, #tpu.memory_space<vmem>>, vector<16x16xbf16>
    tpu.vector_store %arg8[%c0_7, %c0_8], %10 {strides = array<i32>} : memref<16x16xbf16, #tpu.memory_space<vmem>>, vector<16x16xbf16>,
    %c0_9 = arith.constant 0 : index
    %c0_10 = arith.constant 0 : index
    %12 = vector.load %arg5[%c0_9, %c0_10] : memref<8x16xbf16, #tpu.memory_space<vmem>>, vector<8x16xbf16>
    %c0_11 = arith.constant 0 : index
    %c0_12 = arith.constant 0 : index
    %13 = vector.load %arg8[%c0_11, %c0_12] : memref<16x16xbf16, #tpu.memory_space<vmem>>, vector<16x16xbf16>
    %cst_13 = arith.constant dense<0.000000e+00> : vector<8x16xf32>
    %14 = tpu.matmul %12, %13, %cst_13 {dimension_numbers = #tpu.dot_dimension_numbers<[1], [0], [0], [1], [0, 0, 1, 1], [], []>} : vector<8x16xbf16>, vector<16x16xbf16>, vector<8x16xf32> -> vector<8x16xf32>
    %c0_14 = arith.constant 0 : index
    %c0_15 = arith.constant 0 : index
    %15 = vector.load %arg6[%c0_14, %c0_15] : memref<8x1xf32, #tpu.memory_space<vmem>>, vector<8x1xf32>
    %16 = vector.broadcast %15 : vector<8x1xf32> to vector<8x16xf32>
    %17 = arith.addf %14, %16 : vector<8x16xf32>
    %c0_16 = arith.constant 0 : index
    %c0_17 = arith.constant 0 : index
    %c0_18 = arith.constant 0 : index
    %18 = vector.load %arg7[%c0_16, %c0_17, %c0_18] : memref<1x8x16xf32, #tpu.memory_space<vmem>>, vector<1x8x16xf32>
    %19 = vector.shape_cast %18 : vector<1x8x16xf32> to vector<8x16xf32>
    %20 = vector.shape_cast %17 : vector<8x16xf32> to vector<1x8x16xf32>
    tpu.vector_store %arg7[%c0_16, %c0_17, %c0_18], %20 {strides = array<i32>} : memref<1x8x16xf32, #tpu.memory_space<vmem>>, vector<1x8x16xf32>,
    return
  }
  func.func @transform_0(%arg0: i32, %arg1: i32) -> (i32, i32, i32) {
    %c0_i32 = arith.constant 0 : i32
    %c0_i32_0 = arith.constant 0 : i32
    return %arg0, %c0_i32, %arg1 : i32, i32, i32
  }
  func.func @transform_1(%arg0: i32, %arg1: i32) -> (i32, i32) {
    %c0_i32 = arith.constant 0 : i32
    %c0_i32_0 = arith.constant 0 : i32
    %c0_i32_1 = arith.constant 0 : i32
    return %c0_i32, %c0_i32_0 : i32, i32
  }
  func.func @transform_2(%arg0: i32, %arg1: i32) -> (i32, i32) {
    %c0_i32 = arith.constant 0 : i32
    %c0_i32_0 = arith.constant 0 : i32
    %c0_i32_1 = arith.constant 0 : i32
    return %c0_i32, %c0_i32_0 : i32, i32
  }
  func.func @transform_3(%arg0: i32, %arg1: i32) -> (i32, i32) {
    %c0_i32 = arith.constant 0 : i32
    %c0_i32_0 = arith.constant 0 : i32
    %c0_i32_1 = arith.constant 0 : i32
    return %c0_i32, %c0_i32_0 : i32, i32
  }
  func.func @transform_4(%arg0: i32, %arg1: i32) -> (i32, i32) {
    %c0_i32 = arith.constant 0 : i32
    %c0_i32_0 = arith.constant 0 : i32
    %c0_i32_1 = arith.constant 0 : i32
    return %c0_i32, %c0_i32_0 : i32, i32
  }
  func.func @transform_5(%arg0: i32, %arg1: i32) -> (i32, i32, i32) {
    %c0_i32 = arith.constant 0 : i32
    %c0_i32_0 = arith.constant 0 : i32
    return %arg0, %c0_i32, %arg1 : i32, i32, i32
  }
}

module attributes {stable_mosaic.version = 11 : i64} {
  func.func @_ff_kernel(%arg0: i32, %arg1: i32, %arg2: memref<1x4x16xf32, #tpu.memory_space<vmem>>, %arg3: memref<16x4xbf16, #tpu.memory_space<vmem>>, %arg4: memref<16x1xf32, #tpu.memory_space<vmem>>, %arg5: memref<8x16xbf16, #tpu.memory_space<vmem>>, %arg6: memref<8x1xf32, #tpu.memory_space<vmem>>, %arg7: memref<1x8x16xf32, #tpu.memory_space<vmem>>, %arg8: memref<16x16xbf16, #tpu.memory_space<vmem>>) attributes {dimension_semantics = [#tpu.dimension_semantics<parallel>, #tpu.dimension_semantics<parallel>], iteration_bounds = array<i64: 2, 1>, scalar_prefetch = 0 : i64, scratch_operands = 1 : i64, tpu.core_type = #tpu.core_type<tc>, window_params = [{transform_indices = @transform_0, window_bounds = array<i64: 1, 4, 16>}, {pipeline_mode = #tpu.pipeline_mode<synchronous>, transform_indices = @transform_1, window_bounds = array<i64: 16, 4>}, {pipeline_mode = #tpu.pipeline_mode<synchronous>, transform_indices = @transform_2, window_bounds = array<i64: 16, 1>}, {pipeline_mode = #tpu.pipeline_mode<synchronous>, transform_indices = @transform_3, window_bounds = array<i64: 8, 16>}, {pipeline_mode = #tpu.pipeline_mode<synchronous>, transform_indices = @transform_4, window_bounds = array<i64: 8, 1>}, {transform_indices = @transform_5, window_bounds = array<i64: 1, 8, 16>}]} {
    %c0 = arith.constant 0 : index
    %c0_0 = arith.constant 0 : index
    %c0_1 = arith.constant 0 : index
    %0 = vector.load %arg2[%c0, %c0_0, %c0_1] : memref<1x4x16xf32, #tpu.memory_space<vmem>>, vector<1x4x16xf32>
    %1 = vector.shape_cast %0 : vector<1x4x16xf32> to vector<4x16xf32>
    %2 = arith.truncf %1 : vector<4x16xf32> to vector<4x16xbf16>
    %c0_2 = arith.constant 0 : index
    %c0_3 = arith.constant 0 : index
    %3 = vector.load %arg3[%c0_2, %c0_3] : memref<16x4xbf16, #tpu.memory_space<vmem>>, vector<16x4xbf16>
    %cst = arith.constant dense<0.000000e+00> : vector<16x16xf32>
    %4 = tpu.matmul %3, %2, %cst {dimension_numbers = #tpu.dot_dimension_numbers<[1], [0], [0], [1], [0, 0, 1, 1], [], []>} : vector<16x4xbf16>, vector<4x16xbf16>, vector<16x16xf32> -> vector<16x16xf32>
    %c0_4 = arith.constant 0 : index
    %c0_5 = arith.constant 0 : index
    %5 = vector.load %arg4[%c0_4, %c0_5] : memref<16x1xf32, #tpu.memory_space<vmem>>, vector<16x1xf32>
    %6 = vector.broadcast %5 : vector<16x1xf32> to vector<16x16xf32>
    %7 = arith.addf %4, %6 : vector<16x16xf32>
    %cst_6 = arith.constant 0.000000e+00 : f32
    %8 = vector.broadcast %cst_6 : f32 to vector<16x16xf32>
    %9 = arith.maximumf %7, %8 : vector<16x16xf32>
    %10 = arith.truncf %9 : vector<16x16xf32> to vector<16x16xbf16>
    %c0_7 = arith.constant 0 : index
    %c0_8 = arith.constant 0 : index
    %11 = vector.load %arg8[%c0_7, %c0_8] : memref<16x16xbf16, #tpu.memory_space<vmem>>, vector<16x16xbf16>
    tpu.vector_store %arg8[%c0_7, %c0_8], %10 {strides = array<i32>} : memref<16x16xbf16, #tpu.memory_space<vmem>>, vector<16x16xbf16>,
    %c0_9 = arith.constant 0 : index
    %c0_10 = arith.constant 0 : index
    %12 = vector.load %arg5[%c0_9, %c0_10] : memref<8x16xbf16, #tpu.memory_space<vmem>>, vector<8x16xbf16>
    %c0_11 = arith.constant 0 : index
    %c0_12 = arith.constant 0 : index
    %13 = vector.load %arg8[%c0_11, %c0_12] : memref<16x16xbf16, #tpu.memory_space<vmem>>, vector<16x16xbf16>
    %cst_13 = arith.constant dense<0.000000e+00> : vector<8x16xf32>
    %14 = tpu.matmul %12, %13, %cst_13 {dimension_numbers = #tpu.dot_dimension_numbers<[1], [0], [0], [1], [0, 0, 1, 1], [], []>} : vector<8x16xbf16>, vector<16x16xbf16>, vector<8x16xf32> -> vector<8x16xf32>
    %c0_14 = arith.constant 0 : index
    %c0_15 = arith.constant 0 : index
    %15 = vector.load %arg6[%c0_14, %c0_15] : memref<8x1xf32, #tpu.memory_space<vmem>>, vector<8x1xf32>
    %16 = vector.broadcast %15 : vector<8x1xf32> to vector<8x16xf32>
    %17 = arith.addf %14, %16 : vector<8x16xf32>
    %c0_16 = arith.constant 0 : index
    %c0_17 = arith.constant 0 : index
    %c0_18 = arith.constant 0 : index
    %18 = vector.load %arg7[%c0_16, %c0_17, %c0_18] : memref<1x8x16xf32, #tpu.memory_space<vmem>>, vector<1x8x16xf32>
    %19 = vector.shape_cast %18 : vector<1x8x16xf32> to vector<8x16xf32>
    %20 = vector.shape_cast %17 : vector<8x16xf32> to vector<1x8x16xf32>
    tpu.vector_store %arg7[%c0_16, %c0_17, %c0_18], %20 {strides = array<i32>} : memref<1x8x16xf32, #tpu.memory_space<vmem>>, vector<1x8x16xf32>,
    return
  }
  func.func @transform_0(%arg0: i32, %arg1: i32) -> (i32, i32, i32) {
    %c0_i32 = arith.constant 0 : i32
    %c0_i32_0 = arith.constant 0 : i32
    return %arg0, %c0_i32, %arg1 : i32, i32, i32
  }
  func.func @transform_1(%arg0: i32, %arg1: i32) -> (i32, i32) {
    %c0_i32 = arith.constant 0 : i32
    %c0_i32_0 = arith.constant 0 : i32
    %c0_i32_1 = arith.constant 0 : i32
    return %c0_i32, %c0_i32_0 : i32, i32
  }
  func.func @transform_2(%arg0: i32, %arg1: i32) -> (i32, i32) {
    %c0_i32 = arith.constant 0 : i32
    %c0_i32_0 = arith.constant 0 : i32
    %c0_i32_1 = arith.constant 0 : i32
    return %c0_i32, %c0_i32_0 : i32, i32
  }
  func.func @transform_3(%arg0: i32, %arg1: i32) -> (i32, i32) {
    %c0_i32 = arith.constant 0 : i32
    %c0_i32_0 = arith.constant 0 : i32
    %c0_i32_1 = arith.constant 0 : i32
    return %c0_i32, %c0_i32_0 : i32, i32
  }
  func.func @transform_4(%arg0: i32, %arg1: i32) -> (i32, i32) {
    %c0_i32 = arith.constant 0 : i32
    %c0_i32_0 = arith.constant 0 : i32
    %c0_i32_1 = arith.constant 0 : i32
    return %c0_i32, %c0_i32_0 : i32, i32
  }
  func.func @transform_5(%arg0: i32, %arg1: i32) -> (i32, i32, i32) {
    %c0_i32 = arith.constant 0 : i32
    %c0_i32_0 = arith.constant 0 : i32
    return %arg0, %c0_i32, %arg1 : i32, i32, i32
  }
}

</mosaic_0001>

<llo_original>
// kernel: tpu_custom_call.1
$region0: #{tpu_custom_call.1}
  #allocation0 [shape = 'u32[]', space=smem, size = 0x4, offset = 0x4, fixed_abs, tag = 'smem constant byte address 0x4 - core index']
  #allocation1 [shape = 'u32[72,128]{1,0:T(1,128)}', space=vmem, size = 0x9000, scoped, tag = 'internal scratch']
  #allocation2 [shape = 'bf16[16,16]{1,0:T(8,128)(2,1)}', space=vmem, size = 0x1000, scoped, tag = 'scratch operand']
  %s0 = inlined_call_operand.vmem [shape: f32[2,4,16], index: 0, kind: input, shape index: {}]
  %s1 = inlined_call_operand.vmem [shape: bf16[16,4], index: 1, kind: input, shape index: {}]
  %s2 = inlined_call_operand.vmem [shape: f32[16,1], index: 2, kind: input, shape index: {}]
  %s3 = inlined_call_operand.vmem [shape: bf16[8,16], index: 3, kind: input, shape index: {}]
  %s4 = inlined_call_operand.vmem [shape: f32[8,1], index: 4, kind: input, shape index: {}]
  %s5 = inlined_call_operand.hbm [shape: f32[2,8,16], index: 5, kind: output, shape index: {}]
  %s6 = sld [smem:[#allocation0]]
  $region53: #{tpu_custom_call.1} parent=0
    _
  %s8 = ssub.s32 1, %s6
  %s9 = scalar_select 0, %s8, %s6
  $region1: #{tpu_custom_call.1} parent=0
    #allocation3 [shape = 'u8[8192]{0}', space=vmem, size = 0x2000, scoped, tag = 'output window, operand 0']
    #allocation4 [shape = 's32[2]{0}', space=sflag, size = 0x8, scoped, tag = 'scoped memory for tpu_custom_call.1']
    %10 = vsyncpa [#allocation4], 0
    %s11 = scalar_lea.sflag [#allocation4], 1
    %12 = vsyncpa %s11, 0
    loop: start=0, step=1, limit=4
    $region2: #{tpu_custom_call.1} parent=1 // loop_pre_header
      _
    $region3: #{tpu_custom_call.1} parent=1 // loop_header
      %s14 = sphi 0, %s18
      %p15 = scmp.ge.s32.totalorder %s14, 4
      %s21 = sphi 0, %s33
      %s22 = sphi 0, %s29
      %s23 = sphi 0, %s21
      %s24 = sphi 0, %s22
      %s25 = sphi 0, %s23
      %s26 = sphi 0, %s24
      %s38 = sphi 0, %s40
      %s41 = sphi 0, %s38
      %s42 = sphi 0, %s41
      %s58 = sphi 0, %s42
      %s62 = sphi 0, %s62
      %s64 = sphi 0, %s62
      %s65 = sphi 0, %s64
      %s79 = sphi 0, %s65
      %s83 = sphi 0, %s83
      %s85 = sphi 0, %s83
      %s86 = sphi 0, %s85
      %s100 = sphi 0, %s86
      %s104 = sphi 0, %s104
      %s106 = sphi 0, %s104
      %s107 = sphi 0, %s106
      %s121 = sphi 0, %s107
      %s125 = sphi 0, %s125
      %s127 = sphi 0, %s125
      %s128 = sphi 0, %s127
      %s142 = sphi 0, %s128
      %s150 = sphi 0, %s152
      %s153 = sphi 0, %s150
      %s154 = sphi 0, %s153
      %s170 = sphi 0, %s154
    $region4: #{tpu_custom_call.1} parent=1 // loop_header_branch
      %17 = sbr.rel (%p15) target = $region8
    $region5: #{tpu_custom_call.1} parent=1 // loop_body
      %s19 = ssub.s32 %s14, 1
      %s20 = ssub.s32 %s14, 2
      %s27 = sadd.s32 1, %s22
      %p28 = scmp.ge.s32.totalorder %s27, 1
      %s29 = scalar_select %p28, 0, %s27
      %s30 = sadd.s32 1, %s21
      %s31 = scalar_select %p28, %s30, %s21
      %p32 = scmp.ge.s32.totalorder %s31, 2
      %s33 = scalar_select %p32, 0, %s31
      %s34 = ssub.s32 %s21, %s33
      %s35 = ssub.s32 %s22, %s29
      %s36 = sor.u32 %s34, %s35
      %p37 = scmp.eq.s32.totalorder %s36, 0
      %s39 = sadd.s32 %s38, 1
      %s40 = scalar_select %p37, %s38, %s39
      %p43 = pneg %p37
      %p44 = scmp.eq.s32.totalorder %s14, 1
      %p45 = por %p43, %p44
      %p46 = scmp.ne.s32.totalorder %s38, %s41
      %p47 = scmp.eq.s32.totalorder %s14, 0
      %p48 = por %p46, %p47
      %p49 = scmp.ne.s32.totalorder %s38, %s41
      %p50 = scmp.eq.s32.totalorder %s19, 1
      %p51 = por %p49, %p50
      %p52 = scmp.ne.s32.totalorder %s41, %s42
      %p53 = scmp.eq.s32.totalorder %s19, 0
      %p54 = por %p52, %p53
      %p55 = scmp.ne.s32.totalorder %s41, %s42
      %p56 = scmp.eq.s32.totalorder %s20, 1
      %p57 = por %p55, %p56
      %p59 = scmp.ne.s32.totalorder %s42, %s58
      %p60 = scmp.eq.s32.totalorder %s20, 0
      %p61 = por %p59, %p60
      %s63 = sadd.s32 %s62, 1
      %p66 = scmp.eq.s32.totalorder %s14, 1
      %p67 = scmp.ne.s32.totalorder %s62, %s64
      %p68 = scmp.eq.s32.totalorder %s14, 0
      %p69 = por %p67, %p68
      %p70 = scmp.ne.s32.totalorder %s62, %s64
      %p71 = scmp.eq.s32.totalorder %s19, 1
      %p72 = por %p70, %p71
      %p73 = scmp.ne.s32.totalorder %s64, %s65
      %p74 = scmp.eq.s32.totalorder %s19, 0
      %p75 = por %p73, %p74
      %p76 = scmp.ne.s32.totalorder %s64, %s65
      %p77 = scmp.eq.s32.totalorder %s20, 1
      %p78 = por %p76, %p77
      %p80 = scmp.ne.s32.totalorder %s65, %s79
      %p81 = scmp.eq.s32.totalorder %s20, 0
      %p82 = por %p80, %p81
      %s84 = sadd.s32 %s83, 1
      %p87 = scmp.eq.s32.totalorder %s14, 1
      %p88 = scmp.ne.s32.totalorder %s83, %s85
      %p89 = scmp.eq.s32.totalorder %s14, 0
      %p90 = por %p88, %p89
      %p91 = scmp.ne.s32.totalorder %s83, %s85
      %p92 = scmp.eq.s32.totalorder %s19, 1
      %p93 = por %p91, %p92
      %p94 = scmp.ne.s32.totalorder %s85, %s86
      %p95 = scmp.eq.s32.totalorder %s19, 0
      %p96 = por %p94, %p95
      %p97 = scmp.ne.s32.totalorder %s85, %s86
      %p98 = scmp.eq.s32.totalorder %s20, 1
      %p99 = por %p97, %p98
      %p101 = scmp.ne.s32.totalorder %s86, %s100
      %p102 = scmp.eq.s32.totalorder %s20, 0
      %p103 = por %p101, %p102
      %s105 = sadd.s32 %s104, 1
      %p108 = scmp.eq.s32.totalorder %s14, 1
      %p109 = scmp.ne.s32.totalorder %s104, %s106
      %p110 = scmp.eq.s32.totalorder %s14, 0
      %p111 = por %p109, %p110
      %p112 = scmp.ne.s32.totalorder %s104, %s106
      %p113 = scmp.eq.s32.totalorder %s19, 1
      %p114 = por %p112, %p113
      %p115 = scmp.ne.s32.totalorder %s106, %s107
      %p116 = scmp.eq.s32.totalorder %s19, 0
      %p117 = por %p115, %p116
      %p118 = scmp.ne.s32.totalorder %s106, %s107
      %p119 = scmp.eq.s32.totalorder %s20, 1
      %p120 = por %p118, %p119
      %p122 = scmp.ne.s32.totalorder %s107, %s121
      %p123 = scmp.eq.s32.totalorder %s20, 0
      %p124 = por %p122, %p123
      %s126 = sadd.s32 %s125, 1
      %p129 = scmp.eq.s32.totalorder %s14, 1
      %p130 = scmp.ne.s32.totalorder %s125, %s127
      %p131 = scmp.eq.s32.totalorder %s14, 0
      %p132 = por %p130, %p131
      %p133 = scmp.ne.s32.totalorder %s125, %s127
      %p134 = scmp.eq.s32.totalorder %s19, 1
      %p135 = por %p133, %p134
      %p136 = scmp.ne.s32.totalorder %s127, %s128
      %p137 = scmp.eq.s32.totalorder %s19, 0
      %p138 = por %p136, %p137
      %p139 = scmp.ne.s32.totalorder %s127, %s128
      %p140 = scmp.eq.s32.totalorder %s20, 1
      %p141 = por %p139, %p140
      %p143 = scmp.ne.s32.totalorder %s128, %s142
      %p144 = scmp.eq.s32.totalorder %s20, 0
      %p145 = por %p143, %p144
      %s146 = ssub.s32 %s21, %s33
      %s147 = ssub.s32 %s22, %s29
      %s148 = sor.u32 %s146, %s147
      %p149 = scmp.eq.s32.totalorder %s148, 0
      %s151 = sadd.s32 %s150, 1
      %s152 = scalar_select %p149, %s150, %s151
      %p155 = pneg %p149
      %p156 = scmp.eq.s32.totalorder %s14, 1
      %p157 = por %p155, %p156
      %p158 = scmp.ne.s32.totalorder %s150, %s153
      %p159 = scmp.eq.s32.totalorder %s14, 0
      %p160 = por %p158, %p159
      %p161 = scmp.ne.s32.totalorder %s150, %s153
      %p162 = scmp.eq.s32.totalorder %s19, 1
      %p163 = por %p161, %p162
      %p164 = scmp.ne.s32.totalorder %s153, %s154
      %p165 = scmp.eq.s32.totalorder %s19, 0
      %p166 = por %p164, %p165
      %p167 = scmp.ne.s32.totalorder %s153, %s154
      %p168 = scmp.eq.s32.totalorder %s20, 1
      %p169 = por %p167, %p168
      %p171 = scmp.ne.s32.totalorder %s154, %s170
      %p172 = scmp.eq.s32.totalorder %s20, 0
      %p173 = por %p171, %p172
      %p174 = scmp.le.s32.totalorder 1, %s14
      %p175 = scmp.lt.s32.totalorder %s14, 3
      %p176 = pnand %p174, %p175
      %p177 = pneg %p176
      // Predicated region
      $region9: #{tpu_custom_call.1} parent=5 // pred_check
        _
      $region10: #{tpu_custom_call.1} parent=5 // pred_check_branch
        %179 = sbr.rel (%p176) target = $region12
      $region11: #{tpu_custom_call.1} parent=5 // pred_region
        %s180 = ssub.s32 %s14, 1
        // Predicated region
        $region13: #{tpu_custom_call.1} parent=11 // pred_check
          %p181 = pneg %p75
        $region14: #{tpu_custom_call.1} parent=11 // pred_check_branch
          %183 = sbr.rel (%p181) target = $region16
        $region15: #{tpu_custom_call.1} parent=11 // pred_region
          _
        $region16: #{tpu_custom_call.1} parent=11 // pred_fallthru
          _
        // Predicated region
        $region17: #{tpu_custom_call.1} parent=11 // pred_check
          %p184 = pneg %p96
        $region18: #{tpu_custom_call.1} parent=11 // pred_check_branch
          %186 = sbr.rel (%p184) target = $region20
        $region19: #{tpu_custom_call.1} parent=11 // pred_region
          _
        $region20: #{tpu_custom_call.1} parent=11 // pred_fallthru
          _
        // Predicated region
        $region21: #{tpu_custom_call.1} parent=11 // pred_check
          %p187 = pneg %p117
        $region22: #{tpu_custom_call.1} parent=11 // pred_check_branch
          %189 = sbr.rel (%p187) target = $region24
        $region23: #{tpu_custom_call.1} parent=11 // pred_region
          _
        $region24: #{tpu_custom_call.1} parent=11 // pred_fallthru
          _
        // Predicated region
        $region25: #{tpu_custom_call.1} parent=11 // pred_check
          %p190 = pneg %p138
        $region26: #{tpu_custom_call.1} parent=11 // pred_check_branch
          %192 = sbr.rel (%p190) target = $region28
        $region27: #{tpu_custom_call.1} parent=11 // pred_region
          _
        $region28: #{tpu_custom_call.1} parent=11 // pred_fallthru
          _
      $region12: #{tpu_custom_call.1} parent=5 // pred_fallthru
        _
      %p193 = scmp.lt.s32.totalorder %s14, 2
      // Predicated region
      $region29: #{tpu_custom_call.1} parent=5 // pred_check
        %p194 = pneg %p193
      $region30: #{tpu_custom_call.1} parent=5 // pred_check_branch
        %196 = sbr.rel (%p194) target = $region32
      $region31: #{tpu_custom_call.1} parent=5 // pred_region
        // Predicated region
        $region33: #{tpu_custom_call.1} parent=31 // pred_check
          %p197 = pneg %p48
        $region34: #{tpu_custom_call.1} parent=31 // pred_check_branch
          %199 = sbr.rel (%p197) target = $region36
        $region35: #{tpu_custom_call.1} parent=31 // pred_region
          %p200 = scmp.lt.s32.totalorder %s21, 1
          %s201 = scalar_select %p200, %s21, 1
          %p202 = scmp.lt.s32.totalorder %s22, 0
          %s203 = scalar_select %p202, %s22, 0
          %s204 = sadd.s32 %s203, %s201
          %s205 = smul.addr %s204, 4
          %s206 = scalar_lea.vmem %s0, %s205
        $region36: #{tpu_custom_call.1} parent=31 // pred_fallthru
          _
      $region32: #{tpu_custom_call.1} parent=5 // pred_fallthru
        _
      %p207 = scmp.le.s32.totalorder 1, %s14
      %p208 = scmp.lt.s32.totalorder %s14, 3
      %p209 = pnand %p207, %p208
      %p210 = pneg %p209
      // Predicated region
      $region37: #{tpu_custom_call.1} parent=5 // pred_check
        _
      $region38: #{tpu_custom_call.1} parent=5 // pred_check_branch
        %212 = sbr.rel (%p209) target = $region40
      $region39: #{tpu_custom_call.1} parent=5 // pred_region
        %s213 = ssub.s32 %s14, 1
        %p214 = scmp.lt.s32.totalorder %s23, 1
        %s215 = scalar_select %p214, %s23, 1
        %p216 = scmp.lt.s32.totalorder %s24, 0
        %s217 = scalar_select %p216, %s24, 0
        %s218 = sadd.s32 %s217, %s215
        %s219 = smul.addr %s218, 4
        %s220 = scalar_lea.vmem %s0, %s219
        %p221 = pneg %p54
        %p222 = pneg %p51
        %p223 = pneg %p75
        %p224 = pneg %p72
        %p225 = pneg %p96
        %p226 = pneg %p93
        %p227 = pneg %p117
        %p228 = pneg %p114
        %p229 = pneg %p138
        %p230 = pneg %p135
        %p231 = pneg %p166
        %p232 = pneg %p163
        %s233 = sand.u32 %s153, 1
        %s234 = scalar_lea.sflag [#allocation4], %s233
        %s235 = sand.u32 %s153, 1
        %s236 = smul.addr %s235, 8
        %s237 = scalar_lea.vmem [#allocation3], %s236
        %p238 = scmp.lt.s32.totalorder %s23, 1
        %s239 = scalar_select %p238, %s23, 1
        %p240 = scmp.lt.s32.totalorder %s24, 0
        %s241 = scalar_select %p240, %s24, 0
        %s242 = sadd.s32 %s241, %s239
        %s243 = smul.addr %s242, 4
        %s244 = scalar_lea.vmem %s0, %s243
        %v246 = vld [vmem:[%s244] sm:$0xf]
        %v247 = vpack.c.bf16 %v246, %v246
        %v248 = vld [vmem:[%s1] sm:$0xf]
        %v249 = vld [vmem:[%s1 + $0x4] sm:$0xf]
        %v250 = vld [vmem:[%s2] sm:$0xff]
        %v251 = vld [vmem:[%s2 + $0x8] sm:$0xff]
        %253 = vset.pattern.permute.xlu0 0
        %254 = vperm.xlu0 %253, %v250
        %v255 = vpop.permute.xlu0 %254
        %258 = vset.pattern.permute.xlu0 0
        %259 = vperm.xlu0 %258, %v251
        %v260 = vpop.permute.xlu0 %259
        %v264 = vunpack.c.l.b16 %v248
        %v265 = vunpack.c.l.b16 %v249
        %v266 = vpack.c.b16 %v265, %v264
        %vm267 = vcmask 31744
        %v269 = vsel %vm267, %v266, 0
        %vm271 = vcmask 1041408
        %v273 = vsel %vm271, %v247, 0
        %275 = vmatpush.bf16.msra.mxu0 0
        %276 = vmatpush.bf16.msra.mxu0 0
        %277 = vmatpush.bf16.msra.mxu0 0
        %278 = vmatpush.bf16.msra.mxu0 0
        %279 = vmatpush.bf16.msra.mxu0 0
        %280 = vmatpush.bf16.msra.mxu0 0
        %281 = vmatpush.bf16.msra.mxu0 0
        %282 = vmatpush.bf16.msra.mxu0 %v273
        %283 = vmatmul.bf16.gmra.mxu0 %v269
        %v284 = vpop.f32.mrf.mxu0
        %v285 = vadd.f32 %v255, %v284
        %v286 = vpop.f32.mrf.mxu0
        %v287 = vadd.f32 %v260, %v286
        %288 = vdwg.mxu0
        %v289 = vmax.f32 %v285, 0.0
        %v290 = vmax.f32 %v287, 0.0
        %v291 = vpack.c.bf16 %v289, %v289
        %v292 = vpack.c.bf16 %v290, %v290
        %vm293 = vcmask 125952
        %294 = vst.msk [vmem:[#allocation2] sm:$0xf] %vm293, %v291
        %295 = vst.msk [vmem:[#allocation2 + $0x4] sm:$0xf] %vm293, %v292
        %v296 = vld [vmem:[%s3] sm:$0xf]
        %v297 = vld [vmem:[#allocation2] sm:$0xf]
        %v298 = vld [vmem:[#allocation2 + $0x4] sm:$0xf]
        %v299 = vld [vmem:[%s4] sm:$0xff]
        %301 = vset.pattern.permute.xlu0 0
        %302 = vperm.xlu0 %301, %v299
        %v303 = vpop.permute.xlu0 %302
        %v307 = vunpack.c.l.b16 %v297
        %v308 = vunpack.c.l.b16 %v298
        %v309 = vpack.c.b16 %v308, %v307
        %vm311 = vcmask 130048
        %v313 = vsel %vm311, %v296, 0
        %315 = vmatpush.bf16.msra.mxu0 0
        %316 = vmatpush.bf16.msra.mxu0 0
        %317 = vmatpush.bf16.msra.mxu0 0
        %318 = vmatpush.bf16.msra.mxu0 0
        %319 = vmatpush.bf16.msra.mxu0 0
        %320 = vmatpush.bf16.msra.mxu0 0
        %321 = vmatpush.bf16.msra.mxu0 0
        %322 = vmatpush.bf16.msra.mxu0 %v309
        %323 = vmatmul.bf16.gmra.mxu0 %v313
        %v324 = vpop.f32.mrf.mxu0
        %v325 = vadd.f32 %v303, %v324
        %v326 = vpop.f32.mrf.mxu0
        %327 = vdwg.mxu0
        %328 = vst.msk [vmem:[%s237] sm:$0xff] %vm311, %v325
        %s329 = sand.u32 %s153, 1
        %s330 = scalar_lea.sflag [#allocation4], %s329
        %s331 = sand.u32 %s153, 1
        %s332 = smul.addr %s331, 8
        %s333 = scalar_lea.vmem [#allocation3], %s332
        // Predicated region
        $region41: #{tpu_custom_call.1} parent=39 // pred_check
          %p334 = pneg %p163
        $region42: #{tpu_custom_call.1} parent=39 // pred_check_branch
          %336 = sbr.rel (%p334) target = $region44
        $region43: #{tpu_custom_call.1} parent=39 // pred_region
          %338 = vsyncadd %s330, 0
          %s339 = sadd.s32 %s24, %s23
          %s340 = smul.addr %s339, 8
          %s341 = scalar_lea.hbm %s5, %s340
          %s343 = sshll.u32 %s333, 4
          %s344 = int_to_ptr.vmem [resolvable:$true] %s343
          %s345 = sshll.u32 %s341, 4
          %s346 = int_to_ptr.hbm [resolvable:$true] %s345
          %348 = dma.vmem_to_hbm [thread:$0]  %s344, 128, %s346, %s330
        $region44: #{tpu_custom_call.1} parent=39 // pred_fallthru
          _
      $region40: #{tpu_custom_call.1} parent=5 // pred_fallthru
        _
      %p349 = scmp.le.s32.totalorder 2, %s14
      // Predicated region
      $region45: #{tpu_custom_call.1} parent=5 // pred_check
        %p350 = pneg %p349
      $region46: #{tpu_custom_call.1} parent=5 // pred_check_branch
        %352 = sbr.rel (%p350) target = $region48
      $region47: #{tpu_custom_call.1} parent=5 // pred_region
        %s353 = ssub.s32 %s14, 2
        // Predicated region
        $region49: #{tpu_custom_call.1} parent=47 // pred_check
          %p354 = pneg %p169
        $region50: #{tpu_custom_call.1} parent=47 // pred_check_branch
          %356 = sbr.rel (%p354) target = $region52
        $region51: #{tpu_custom_call.1} parent=47 // pred_region
          %s357 = sand.u32 %s154, 1
          %s358 = scalar_lea.sflag [#allocation4], %s357
          %s359 = sand.u32 %s154, 1
          %s360 = smul.addr %s359, 8
          %s361 = scalar_lea.vmem [#allocation3], %s360
          %363 = dma.done %s358, 128
        $region52: #{tpu_custom_call.1} parent=47 // pred_fallthru
          _
      $region48: #{tpu_custom_call.1} parent=5 // pred_fallthru
        _
    $region6: #{tpu_custom_call.1} parent=1 // loop_footer
      %s18 = sadd.s32 1, %s14
    $region7: #{tpu_custom_call.1} parent=1 // loop_footer_branch
      %13 = sbr.rel target = $region3
    $region8: #{tpu_custom_call.1} parent=1 // loop_exit
      _
    %364 = vsyncpa [#allocation4], 1
    %s365 = scalar_lea.sflag [#allocation4], 1
    %366 = vsyncpa %s365, 1

// kernel: tpu_custom_call.1
$region0: #{tpu_custom_call.1}
  #allocation0 [shape = 'u32[]', space=smem, size = 0x4, offset = 0x4, fixed_abs, tag = 'smem constant byte address 0x4 - core index']
  #allocation1 [shape = 'u32[72,128]{1,0:T(1,128)}', space=vmem, size = 0x9000, scoped, tag = 'internal scratch']
  #allocation2 [shape = 'bf16[16,16]{1,0:T(8,128)(2,1)}', space=vmem, size = 0x1000, scoped, tag = 'scratch operand']
  %s0 = inlined_call_operand.vmem [shape: f32[2,4,16], index: 0, kind: input, shape index: {}]
  %s1 = inlined_call_operand.vmem [shape: bf16[16,4], index: 1, kind: input, shape index: {}]
  %s2 = inlined_call_operand.vmem [shape: f32[16,1], index: 2, kind: input, shape index: {}]
  %s3 = inlined_call_operand.vmem [shape: bf16[8,16], index: 3, kind: input, shape index: {}]
  %s4 = inlined_call_operand.vmem [shape: f32[8,1], index: 4, kind: input, shape index: {}]
  %s5 = inlined_call_operand.hbm [shape: f32[2,8,16], index: 5, kind: output, shape index: {}]
  %s6 = sld [smem:[#allocation0]]
  $region53: #{tpu_custom_call.1} parent=0
    _
  %s8 = ssub.s32 1, %s6
  %s9 = scalar_select 0, %s8, %s6
  $region1: #{tpu_custom_call.1} parent=0
    #allocation3 [shape = 'u8[8192]{0}', space=vmem, size = 0x2000, scoped, tag = 'output window, operand 0']
    #allocation4 [shape = 's32[2]{0}', space=sflag, size = 0x8, scoped, tag = 'scoped memory for tpu_custom_call.1']
    %10 = vsyncpa [#allocation4], 0
    %s11 = scalar_lea.sflag [#allocation4], 1
    %12 = vsyncpa %s11, 0
    loop: start=0, step=1, limit=4
    $region2: #{tpu_custom_call.1} parent=1 // loop_pre_header
      _
    $region3: #{tpu_custom_call.1} parent=1 // loop_header
      %s14 = sphi 0, %s18
      %p15 = scmp.ge.s32.totalorder %s14, 4
      %s21 = sphi 0, %s33
      %s22 = sphi 0, %s29
      %s23 = sphi 0, %s21
      %s24 = sphi 0, %s22
      %s25 = sphi 0, %s23
      %s26 = sphi 0, %s24
      %s38 = sphi 0, %s40
      %s41 = sphi 0, %s38
      %s42 = sphi 0, %s41
      %s58 = sphi 0, %s42
      %s62 = sphi 0, %s62
      %s64 = sphi 0, %s62
      %s65 = sphi 0, %s64
      %s79 = sphi 0, %s65
      %s83 = sphi 0, %s83
      %s85 = sphi 0, %s83
      %s86 = sphi 0, %s85
      %s100 = sphi 0, %s86
      %s104 = sphi 0, %s104
      %s106 = sphi 0, %s104
      %s107 = sphi 0, %s106
      %s121 = sphi 0, %s107
      %s125 = sphi 0, %s125
      %s127 = sphi 0, %s125
      %s128 = sphi 0, %s127
      %s142 = sphi 0, %s128
      %s150 = sphi 0, %s152
      %s153 = sphi 0, %s150
      %s154 = sphi 0, %s153
      %s170 = sphi 0, %s154
    $region4: #{tpu_custom_call.1} parent=1 // loop_header_branch
      %17 = sbr.rel (%p15) target = $region8
    $region5: #{tpu_custom_call.1} parent=1 // loop_body
      %s19 = ssub.s32 %s14, 1
      %s20 = ssub.s32 %s14, 2
      %s27 = sadd.s32 1, %s22
      %p28 = scmp.ge.s32.totalorder %s27, 1
      %s29 = scalar_select %p28, 0, %s27
      %s30 = sadd.s32 1, %s21
      %s31 = scalar_select %p28, %s30, %s21
      %p32 = scmp.ge.s32.totalorder %s31, 2
      %s33 = scalar_select %p32, 0, %s31
      %s34 = ssub.s32 %s21, %s33
      %s35 = ssub.s32 %s22, %s29
      %s36 = sor.u32 %s34, %s35
      %p37 = scmp.eq.s32.totalorder %s36, 0
      %s39 = sadd.s32 %s38, 1
      %s40 = scalar_select %p37, %s38, %s39
      %p43 = pneg %p37
      %p44 = scmp.eq.s32.totalorder %s14, 1
      %p45 = por %p43, %p44
      %p46 = scmp.ne.s32.totalorder %s38, %s41
      %p47 = scmp.eq.s32.totalorder %s14, 0
      %p48 = por %p46, %p47
      %p49 = scmp.ne.s32.totalorder %s38, %s41
      %p50 = scmp.eq.s32.totalorder %s19, 1
      %p51 = por %p49, %p50
      %p52 = scmp.ne.s32.totalorder %s41, %s42
      %p53 = scmp.eq.s32.totalorder %s19, 0
      %p54 = por %p52, %p53
      %p55 = scmp.ne.s32.totalorder %s41, %s42
      %p56 = scmp.eq.s32.totalorder %s20, 1
      %p57 = por %p55, %p56
      %p59 = scmp.ne.s32.totalorder %s42, %s58
      %p60 = scmp.eq.s32.totalorder %s20, 0
      %p61 = por %p59, %p60
      %s63 = sadd.s32 %s62, 1
      %p66 = scmp.eq.s32.totalorder %s14, 1
      %p67 = scmp.ne.s32.totalorder %s62, %s64
      %p68 = scmp.eq.s32.totalorder %s14, 0
      %p69 = por %p67, %p68
      %p70 = scmp.ne.s32.totalorder %s62, %s64
      %p71 = scmp.eq.s32.totalorder %s19, 1
      %p72 = por %p70, %p71
      %p73 = scmp.ne.s32.totalorder %s64, %s65
      %p74 = scmp.eq.s32.totalorder %s19, 0
      %p75 = por %p73, %p74
      %p76 = scmp.ne.s32.totalorder %s64, %s65
      %p77 = scmp.eq.s32.totalorder %s20, 1
      %p78 = por %p76, %p77
      %p80 = scmp.ne.s32.totalorder %s65, %s79
      %p81 = scmp.eq.s32.totalorder %s20, 0
      %p82 = por %p80, %p81
      %s84 = sadd.s32 %s83, 1
      %p87 = scmp.eq.s32.totalorder %s14, 1
      %p88 = scmp.ne.s32.totalorder %s83, %s85
      %p89 = scmp.eq.s32.totalorder %s14, 0
      %p90 = por %p88, %p89
      %p91 = scmp.ne.s32.totalorder %s83, %s85
      %p92 = scmp.eq.s32.totalorder %s19, 1
      %p93 = por %p91, %p92
      %p94 = scmp.ne.s32.totalorder %s85, %s86
      %p95 = scmp.eq.s32.totalorder %s19, 0
      %p96 = por %p94, %p95
      %p97 = scmp.ne.s32.totalorder %s85, %s86
      %p98 = scmp.eq.s32.totalorder %s20, 1
      %p99 = por %p97, %p98
      %p101 = scmp.ne.s32.totalorder %s86, %s100
      %p102 = scmp.eq.s32.totalorder %s20, 0
      %p103 = por %p101, %p102
      %s105 = sadd.s32 %s104, 1
      %p108 = scmp.eq.s32.totalorder %s14, 1
      %p109 = scmp.ne.s32.totalorder %s104, %s106
      %p110 = scmp.eq.s32.totalorder %s14, 0
      %p111 = por %p109, %p110
      %p112 = scmp.ne.s32.totalorder %s104, %s106
      %p113 = scmp.eq.s32.totalorder %s19, 1
      %p114 = por %p112, %p113
      %p115 = scmp.ne.s32.totalorder %s106, %s107
      %p116 = scmp.eq.s32.totalorder %s19, 0
      %p117 = por %p115, %p116
      %p118 = scmp.ne.s32.totalorder %s106, %s107
      %p119 = scmp.eq.s32.totalorder %s20, 1
      %p120 = por %p118, %p119
      %p122 = scmp.ne.s32.totalorder %s107, %s121
      %p123 = scmp.eq.s32.totalorder %s20, 0
      %p124 = por %p122, %p123
      %s126 = sadd.s32 %s125, 1
      %p129 = scmp.eq.s32.totalorder %s14, 1
      %p130 = scmp.ne.s32.totalorder %s125, %s127
      %p131 = scmp.eq.s32.totalorder %s14, 0
      %p132 = por %p130, %p131
      %p133 = scmp.ne.s32.totalorder %s125, %s127
      %p134 = scmp.eq.s32.totalorder %s19, 1
      %p135 = por %p133, %p134
      %p136 = scmp.ne.s32.totalorder %s127, %s128
      %p137 = scmp.eq.s32.totalorder %s19, 0
      %p138 = por %p136, %p137
      %p139 = scmp.ne.s32.totalorder %s127, %s128
      %p140 = scmp.eq.s32.totalorder %s20, 1
      %p141 = por %p139, %p140
      %p143 = scmp.ne.s32.totalorder %s128, %s142
      %p144 = scmp.eq.s32.totalorder %s20, 0
      %p145 = por %p143, %p144
      %s146 = ssub.s32 %s21, %s33
      %s147 = ssub.s32 %s22, %s29
      %s148 = sor.u32 %s146, %s147
      %p149 = scmp.eq.s32.totalorder %s148, 0
      %s151 = sadd.s32 %s150, 1
      %s152 = scalar_select %p149, %s150, %s151
      %p155 = pneg %p149
      %p156 = scmp.eq.s32.totalorder %s14, 1
      %p157 = por %p155, %p156
      %p158 = scmp.ne.s32.totalorder %s150, %s153
      %p159 = scmp.eq.s32.totalorder %s14, 0
      %p160 = por %p158, %p159
      %p161 = scmp.ne.s32.totalorder %s150, %s153
      %p162 = scmp.eq.s32.totalorder %s19, 1
      %p163 = por %p161, %p162
      %p164 = scmp.ne.s32.totalorder %s153, %s154
      %p165 = scmp.eq.s32.totalorder %s19, 0
      %p166 = por %p164, %p165
      %p167 = scmp.ne.s32.totalorder %s153, %s154
      %p168 = scmp.eq.s32.totalorder %s20, 1
      %p169 = por %p167, %p168
      %p171 = scmp.ne.s32.totalorder %s154, %s170
      %p172 = scmp.eq.s32.totalorder %s20, 0
      %p173 = por %p171, %p172
      %p174 = scmp.le.s32.totalorder 1, %s14
      %p175 = scmp.lt.s32.totalorder %s14, 3
      %p176 = pnand %p174, %p175
      %p177 = pneg %p176
      // Predicated region
      $region9: #{tpu_custom_call.1} parent=5 // pred_check
        _
      $region10: #{tpu_custom_call.1} parent=5 // pred_check_branch
        %179 = sbr.rel (%p176) target = $region12
      $region11: #{tpu_custom_call.1} parent=5 // pred_region
        %s180 = ssub.s32 %s14, 1
        // Predicated region
        $region13: #{tpu_custom_call.1} parent=11 // pred_check
          %p181 = pneg %p75
        $region14: #{tpu_custom_call.1} parent=11 // pred_check_branch
          %183 = sbr.rel (%p181) target = $region16
        $region15: #{tpu_custom_call.1} parent=11 // pred_region
          _
        $region16: #{tpu_custom_call.1} parent=11 // pred_fallthru
          _
        // Predicated region
        $region17: #{tpu_custom_call.1} parent=11 // pred_check
          %p184 = pneg %p96
        $region18: #{tpu_custom_call.1} parent=11 // pred_check_branch
          %186 = sbr.rel (%p184) target = $region20
        $region19: #{tpu_custom_call.1} parent=11 // pred_region
          _
        $region20: #{tpu_custom_call.1} parent=11 // pred_fallthru
          _
        // Predicated region
        $region21: #{tpu_custom_call.1} parent=11 // pred_check
          %p187 = pneg %p117
        $region22: #{tpu_custom_call.1} parent=11 // pred_check_branch
          %189 = sbr.rel (%p187) target = $region24
        $region23: #{tpu_custom_call.1} parent=11 // pred_region
          _
        $region24: #{tpu_custom_call.1} parent=11 // pred_fallthru
          _
        // Predicated region
        $region25: #{tpu_custom_call.1} parent=11 // pred_check
          %p190 = pneg %p138
        $region26: #{tpu_custom_call.1} parent=11 // pred_check_branch
          %192 = sbr.rel (%p190) target = $region28
        $region27: #{tpu_custom_call.1} parent=11 // pred_region
          _
        $region28: #{tpu_custom_call.1} parent=11 // pred_fallthru
          _
      $region12: #{tpu_custom_call.1} parent=5 // pred_fallthru
        _
      %p193 = scmp.lt.s32.totalorder %s14, 2
      // Predicated region
      $region29: #{tpu_custom_call.1} parent=5 // pred_check
        %p194 = pneg %p193
      $region30: #{tpu_custom_call.1} parent=5 // pred_check_branch
        %196 = sbr.rel (%p194) target = $region32
      $region31: #{tpu_custom_call.1} parent=5 // pred_region
        // Predicated region
        $region33: #{tpu_custom_call.1} parent=31 // pred_check
          %p197 = pneg %p48
        $region34: #{tpu_custom_call.1} parent=31 // pred_check_branch
          %199 = sbr.rel (%p197) target = $region36
        $region35: #{tpu_custom_call.1} parent=31 // pred_region
          %p200 = scmp.lt.s32.totalorder %s21, 1
          %s201 = scalar_select %p200, %s21, 1
          %p202 = scmp.lt.s32.totalorder %s22, 0
          %s203 = scalar_select %p202, %s22, 0
          %s204 = sadd.s32 %s203, %s201
          %s205 = smul.addr %s204, 4
          %s206 = scalar_lea.vmem %s0, %s205
        $region36: #{tpu_custom_call.1} parent=31 // pred_fallthru
          _
      $region32: #{tpu_custom_call.1} parent=5 // pred_fallthru
        _
      %p207 = scmp.le.s32.totalorder 1, %s14
      %p208 = scmp.lt.s32.totalorder %s14, 3
      %p209 = pnand %p207, %p208
      %p210 = pneg %p209
      // Predicated region
      $region37: #{tpu_custom_call.1} parent=5 // pred_check
        _
      $region38: #{tpu_custom_call.1} parent=5 // pred_check_branch
        %212 = sbr.rel (%p209) target = $region40
      $region39: #{tpu_custom_call.1} parent=5 // pred_region
        %s213 = ssub.s32 %s14, 1
        %p214 = scmp.lt.s32.totalorder %s23, 1
        %s215 = scalar_select %p214, %s23, 1
        %p216 = scmp.lt.s32.totalorder %s24, 0
        %s217 = scalar_select %p216, %s24, 0
        %s218 = sadd.s32 %s217, %s215
        %s219 = smul.addr %s218, 4
        %s220 = scalar_lea.vmem %s0, %s219
        %p221 = pneg %p54
        %p222 = pneg %p51
        %p223 = pneg %p75
        %p224 = pneg %p72
        %p225 = pneg %p96
        %p226 = pneg %p93
        %p227 = pneg %p117
        %p228 = pneg %p114
        %p229 = pneg %p138
        %p230 = pneg %p135
        %p231 = pneg %p166
        %p232 = pneg %p163
        %s233 = sand.u32 %s153, 1
        %s234 = scalar_lea.sflag [#allocation4], %s233
        %s235 = sand.u32 %s153, 1
        %s236 = smul.addr %s235, 8
        %s237 = scalar_lea.vmem [#allocation3], %s236
        %p238 = scmp.lt.s32.totalorder %s23, 1
        %s239 = scalar_select %p238, %s23, 1
        %p240 = scmp.lt.s32.totalorder %s24, 0
        %s241 = scalar_select %p240, %s24, 0
        %s242 = sadd.s32 %s241, %s239
        %s243 = smul.addr %s242, 4
        %s244 = scalar_lea.vmem %s0, %s243
        %v246 = vld [vmem:[%s244] sm:$0xf]
        %v247 = vpack.c.bf16 %v246, %v246
        %v248 = vld [vmem:[%s1] sm:$0xf]
        %v249 = vld [vmem:[%s1 + $0x4] sm:$0xf]
        %v250 = vld [vmem:[%s2] sm:$0xff]
        %v251 = vld [vmem:[%s2 + $0x8] sm:$0xff]
        %253 = vset.pattern.permute.xlu0 0
        %254 = vperm.xlu0 %253, %v250
        %v255 = vpop.permute.xlu0 %254
        %258 = vset.pattern.permute.xlu0 0
        %259 = vperm.xlu0 %258, %v251
        %v260 = vpop.permute.xlu0 %259
        %v264 = vunpack.c.l.b16 %v248
        %v265 = vunpack.c.l.b16 %v249
        %v266 = vpack.c.b16 %v265, %v264
        %vm267 = vcmask 31744
        %v269 = vsel %vm267, %v266, 0
        %vm271 = vcmask 1041408
        %v273 = vsel %vm271, %v247, 0
        %275 = vmatpush.bf16.msra.mxu0 0
        %276 = vmatpush.bf16.msra.mxu0 0
        %277 = vmatpush.bf16.msra.mxu0 0
        %278 = vmatpush.bf16.msra.mxu0 0
        %279 = vmatpush.bf16.msra.mxu0 0
        %280 = vmatpush.bf16.msra.mxu0 0
        %281 = vmatpush.bf16.msra.mxu0 0
        %282 = vmatpush.bf16.msra.mxu0 %v273
        %283 = vmatmul.bf16.gmra.mxu0 %v269
        %v284 = vpop.f32.mrf.mxu0
        %v285 = vadd.f32 %v255, %v284
        %v286 = vpop.f32.mrf.mxu0
        %v287 = vadd.f32 %v260, %v286
        %288 = vdwg.mxu0
        %v289 = vmax.f32 %v285, 0.0
        %v290 = vmax.f32 %v287, 0.0
        %v291 = vpack.c.bf16 %v289, %v289
        %v292 = vpack.c.bf16 %v290, %v290
        %vm293 = vcmask 125952
        %294 = vst.msk [vmem:[#allocation2] sm:$0xf] %vm293, %v291
        %295 = vst.msk [vmem:[#allocation2 + $0x4] sm:$0xf] %vm293, %v292
        %v296 = vld [vmem:[%s3] sm:$0xf]
        %v297 = vld [vmem:[#allocation2] sm:$0xf]
        %v298 = vld [vmem:[#allocation2 + $0x4] sm:$0xf]
        %v299 = vld [vmem:[%s4] sm:$0xff]
        %301 = vset.pattern.permute.xlu0 0
        %302 = vperm.xlu0 %301, %v299
        %v303 = vpop.permute.xlu0 %302
        %v307 = vunpack.c.l.b16 %v297
        %v308 = vunpack.c.l.b16 %v298
        %v309 = vpack.c.b16 %v308, %v307
        %vm311 = vcmask 130048
        %v313 = vsel %vm311, %v296, 0
        %315 = vmatpush.bf16.msra.mxu0 0
        %316 = vmatpush.bf16.msra.mxu0 0
        %317 = vmatpush.bf16.msra.mxu0 0
        %318 = vmatpush.bf16.msra.mxu0 0
        %319 = vmatpush.bf16.msra.mxu0 0
        %320 = vmatpush.bf16.msra.mxu0 0
        %321 = vmatpush.bf16.msra.mxu0 0
        %322 = vmatpush.bf16.msra.mxu0 %v309
        %323 = vmatmul.bf16.gmra.mxu0 %v313
        %v324 = vpop.f32.mrf.mxu0
        %v325 = vadd.f32 %v303, %v324
        %v326 = vpop.f32.mrf.mxu0
        %327 = vdwg.mxu0
        %328 = vst.msk [vmem:[%s237] sm:$0xff] %vm311, %v325
        %s329 = sand.u32 %s153, 1
        %s330 = scalar_lea.sflag [#allocation4], %s329
        %s331 = sand.u32 %s153, 1
        %s332 = smul.addr %s331, 8
        %s333 = scalar_lea.vmem [#allocation3], %s332
        // Predicated region
        $region41: #{tpu_custom_call.1} parent=39 // pred_check
          %p334 = pneg %p163
        $region42: #{tpu_custom_call.1} parent=39 // pred_check_branch
          %336 = sbr.rel (%p334) target = $region44
        $region43: #{tpu_custom_call.1} parent=39 // pred_region
          %338 = vsyncadd %s330, 0
          %s339 = sadd.s32 %s24, %s23
          %s340 = smul.addr %s339, 8
          %s341 = scalar_lea.hbm %s5, %s340
          %s343 = sshll.u32 %s333, 4
          %s344 = int_to_ptr.vmem [resolvable:$true] %s343
          %s345 = sshll.u32 %s341, 4
          %s346 = int_to_ptr.hbm [resolvable:$true] %s345
          %348 = dma.vmem_to_hbm [thread:$0]  %s344, 128, %s346, %s330
        $region44: #{tpu_custom_call.1} parent=39 // pred_fallthru
          _
      $region40: #{tpu_custom_call.1} parent=5 // pred_fallthru
        _
      %p349 = scmp.le.s32.totalorder 2, %s14
      // Predicated region
      $region45: #{tpu_custom_call.1} parent=5 // pred_check
        %p350 = pneg %p349
      $region46: #{tpu_custom_call.1} parent=5 // pred_check_branch
        %352 = sbr.rel (%p350) target = $region48
      $region47: #{tpu_custom_call.1} parent=5 // pred_region
        %s353 = ssub.s32 %s14, 2
        // Predicated region
        $region49: #{tpu_custom_call.1} parent=47 // pred_check
          %p354 = pneg %p169
        $region50: #{tpu_custom_call.1} parent=47 // pred_check_branch
          %356 = sbr.rel (%p354) target = $region52
        $region51: #{tpu_custom_call.1} parent=47 // pred_region
          %s357 = sand.u32 %s154, 1
          %s358 = scalar_lea.sflag [#allocation4], %s357
          %s359 = sand.u32 %s154, 1
          %s360 = smul.addr %s359, 8
          %s361 = scalar_lea.vmem [#allocation3], %s360
          %363 = dma.done %s358, 128
        $region52: #{tpu_custom_call.1} parent=47 // pred_fallthru
          _
      $region48: #{tpu_custom_call.1} parent=5 // pred_fallthru
        _
    $region6: #{tpu_custom_call.1} parent=1 // loop_footer
      %s18 = sadd.s32 1, %s14
    $region7: #{tpu_custom_call.1} parent=1 // loop_footer_branch
      %13 = sbr.rel target = $region3
    $region8: #{tpu_custom_call.1} parent=1 // loop_exit
      _
    %364 = vsyncpa [#allocation4], 1
    %s365 = scalar_lea.sflag [#allocation4], 1
    %366 = vsyncpa %s365, 1

</llo_original>
